<compile_context>
chip_gen: v6e
topology: v6e:2x2x1
jax: 0.10.0
libtpu: 0.0.40
codegen_flags: <defaults>
</compile_context>

<pallas_src>
import functools

import numpy as np
import jax
import jax.numpy as jnp
from jax.experimental import pallas as pl
from jax.experimental.pallas import tpu as pltpu


def _round_up(n, m):
    return (n + m - 1) // m * m


def _make_encoder_kernel(layer_shapes, w_row_offs, gb_row_offs, eps=1e-5,
                         negative_slope=0.01, vpu_contraction_max_k=8):
    """Fused Linear + BatchNorm1d(train) + LeakyReLU stack.

    Ref order: x, params_slab, out.
      layer_shapes: tuple of (in_dim, out_dim) per layer.
      w_row_offs:   static row offset of each layer's W block in the slab.
      gb_row_offs:  static row offset of each layer's (gamma, beta) row pair.
    """

    def kernel(x_ref, p_ref, out_ref):
        h = x_ref[...].astype(jnp.float32)
        inv_b = 1.0 / h.shape[0]

        for i, (prev_dim, dim) in enumerate(layer_shapes):
            wr = w_row_offs[i]
            gr = gb_row_offs[i]

            if prev_dim <= vpu_contraction_max_k:
                # Tiny contraction on the VPU: avoids MXU push/pop latency at
                # <1% array fill.
                y = h[:, 0:1] * p_ref[wr:wr + 1, 0:dim]
                for k in range(1, prev_dim):
                    y = y + h[:, k:k + 1] * p_ref[wr + k:wr + k + 1, 0:dim]
            else:
                w = p_ref[wr:wr + prev_dim, 0:dim]
                y = jnp.dot(h, w, preferred_element_type=jnp.float32)

            gamma = p_ref[gr:gr + 1, 0:dim]      # (1, dim) static slice
            beta = p_ref[gr + 1:gr + 2, 0:dim]   # (1, dim) static slice

            # Single-pass batch statistics (training-mode BN, biased variance),
            # clamped so fp32 cancellation cannot produce a negative variance.
            mean = jnp.sum(y, axis=0, keepdims=True) * inv_b
            ex2 = jnp.sum(y * y, axis=0, keepdims=True) * inv_b
            var = jnp.maximum(ex2 - mean * mean, 0.0)

            # Folded BN affine: one multiply + one add per element.
            scale = gamma * jax.lax.rsqrt(var + eps)
            shift = beta - mean * scale
            y_hat = y * scale + shift

            # LeakyReLU as a single vmax (valid for 0 < slope < 1).
            h = jnp.maximum(y_hat, negative_slope * y_hat)

        out_ref[...] = h.astype(out_ref.dtype)

    return kernel


def init_params(key, hidden_dimensions, previous_dim=2):
    """Deterministic synthetic init mirroring the PyTorch module's shapes."""
    params = []
    prev = previous_dim
    for dim in hidden_dimensions:
        key, kw, kb = jax.random.split(key, 3)
        bound = 1.0 / jnp.sqrt(jnp.float32(prev))
        w = jax.random.uniform(kw, (prev, dim), jnp.float32, -bound, bound)
        b = jax.random.uniform(kb, (1, dim), jnp.float32, -bound, bound)
        gamma = jnp.ones((1, dim), jnp.float32)   # BatchNorm1d weight default
        beta = jnp.zeros((1, dim), jnp.float32)   # BatchNorm1d bias default
        params.append((w, b, gamma, beta))
        prev = dim
    return params


def prepare_params(params, previous_dim=2):
    """One-time host-side packing of all static params into a single f32 slab.

    Layout (rows x 128-lane-padded columns), all offsets sublane(8)-aligned:
      [W_0 rows][W_1 rows]...[gamma_0; beta_0; gamma_1; beta_1; ...][pad]
    Returns (slab_jnp, meta) where meta is a hashable static descriptor.
    The Linear bias is intentionally not packed: with train-mode BatchNorm it
    is subtracted back out by the batch mean.
    """
    dims = [int(w.shape[1]) for (w, _, _, _) in params]
    c_pack = _round_up(max(dims), 128)

    layer_shapes, w_row_offs = [], []
    row = 0
    prev = int(previous_dim)
    for (w, _, _, _) in params:
        d = int(w.shape[1])
        layer_shapes.append((prev, d))
        w_row_offs.append(row)
        row += _round_up(prev, 8)
        prev = d

    gb_row_offs = []
    for _ in params:
        gb_row_offs.append(row)
        row += 2
    total_rows = _round_up(row, 8)

    slab = np.zeros((total_rows, c_pack), np.float32)
    for i, (w, _b, gamma, beta) in enumerate(params):
        prev_dim, d = layer_shapes[i]
        slab[w_row_offs[i]:w_row_offs[i] + prev_dim, :d] = np.asarray(
            w, dtype=np.float32)
        slab[gb_row_offs[i], :d] = np.asarray(gamma, dtype=np.float32).reshape(-1)
        slab[gb_row_offs[i] + 1, :d] = np.asarray(beta, dtype=np.float32).reshape(-1)

    meta = (tuple(layer_shapes), tuple(w_row_offs), tuple(gb_row_offs))
    return jnp.asarray(slab), meta


@functools.partial(jax.jit, static_argnames=("meta", "eps", "negative_slope"))
def ball_pose_vae_encoder(x, params_slab, meta, eps=1e-5, negative_slope=0.01):
    """Pallas-backed forward pass.

    x: (batch, previous_dim); params_slab/meta from prepare_params().
    The per-call path contains only the pallas_call: no packing, padding,
    casting, or post-call slicing.
    """
    layer_shapes, w_row_offs, gb_row_offs = meta
    batch = x.shape[0]
    last_dim = layer_shapes[-1][1]

    kernel = _make_encoder_kernel(layer_shapes, w_row_offs, gb_row_offs,
                                  eps=eps, negative_slope=negative_slope)

    vmem_spec = pl.BlockSpec(memory_space=pltpu.MemorySpace.VMEM)
    return pl.pallas_call(
        kernel,
        out_shape=jax.ShapeDtypeStruct((batch, last_dim), jnp.float32),
        in_specs=[vmem_spec, vmem_spec],
        out_specs=vmem_spec,
    )(x, params_slab)


def _reference_forward(x, params, eps=1e-5, negative_slope=0.01):
    """Pure-JAX reference matching the PyTorch module (train-mode BN, bias)."""
    h = x.astype(jnp.float32)
    for w, b, gamma, beta in params:
        y = h @ w + b
        mean = jnp.mean(y, axis=0, keepdims=True)
        var = jnp.mean((y - mean) ** 2, axis=0, keepdims=True)
        y = (y - mean) / jnp.sqrt(var + eps)
        y = y * gamma + beta
        h = jnp.where(y >= 0, y, negative_slope * y)
    return h


if __name__ == "__main__":
    key = jax.random.PRNGKey(0)
    k_x, k_p = jax.random.split(key)

    # Small shapes consistent with the module: previous_dim=2 input features.
    batch = 8
    previous_dim = 2
    hidden_dimensions = [32, 64]

    x = jax.random.normal(k_x, (batch, previous_dim), jnp.float32)
    params = init_params(k_p, hidden_dimensions, previous_dim)

    # One-time, out-of-the-hot-path parameter packing.
    params_slab, meta = prepare_params(params, previous_dim)

    out = ball_pose_vae_encoder(x, params_slab, meta=meta)
    out = jax.block_until_ready(out)

    ref = _reference_forward(x, params)
    assert out.shape == (batch, hidden_dimensions[-1])
    assert jnp.allclose(out, ref, atol=2e-4, rtol=2e-4), \
        float(jnp.max(jnp.abs(out - ref)))

    print("KERNEL_OK")
</pallas_src>

<mosaic_0001>
module attributes {stable_mosaic.version = 11 : i64} {
  func.func @kernel(%arg0: memref<8x2xf32, #tpu.memory_space<vmem>>, %arg1: memref<48x128xf32, #tpu.memory_space<vmem>>, %arg2: memref<8x64xf32, #tpu.memory_space<vmem>>) attributes {dimension_semantics = [], scalar_prefetch = 0 : i64, scratch_operands = 0 : i64, tpu.core_type = #tpu.core_type<tc>} {
    %c0 = arith.constant 0 : index
    %c0_0 = arith.constant 0 : index
    %0 = vector.load %arg0[%c0, %c0_0] : memref<8x2xf32, #tpu.memory_space<vmem>>, vector<8x2xf32>
    %1 = vector.extract_strided_slice %0 {offsets = [0, 0], sizes = [8, 1], strides = [1, 1]} : vector<8x2xf32> to vector<8x1xf32>
    %c0_1 = arith.constant 0 : index
    %c0_2 = arith.constant 0 : index
    %2 = vector.load %arg1[%c0_1, %c0_2] : memref<48x128xf32, #tpu.memory_space<vmem>>, vector<1x32xf32>
    %3 = vector.broadcast %1 : vector<8x1xf32> to vector<8x32xf32>
    %4 = vector.broadcast %2 : vector<1x32xf32> to vector<8x32xf32>
    %5 = arith.mulf %3, %4 : vector<8x32xf32>
    %6 = vector.extract_strided_slice %0 {offsets = [0, 1], sizes = [8, 1], strides = [1, 1]} : vector<8x2xf32> to vector<8x1xf32>
    %c1 = arith.constant 1 : index
    %c0_3 = arith.constant 0 : index
    %7 = vector.load %arg1[%c1, %c0_3] : memref<48x128xf32, #tpu.memory_space<vmem>>, vector<1x32xf32>
    %8 = vector.broadcast %6 : vector<8x1xf32> to vector<8x32xf32>
    %9 = vector.broadcast %7 : vector<1x32xf32> to vector<8x32xf32>
    %10 = arith.mulf %8, %9 : vector<8x32xf32>
    %11 = arith.addf %5, %10 : vector<8x32xf32>
    %c40 = arith.constant 40 : index
    %c0_4 = arith.constant 0 : index
    %12 = vector.load %arg1[%c40, %c0_4] : memref<48x128xf32, #tpu.memory_space<vmem>>, vector<1x32xf32>
    %c41 = arith.constant 41 : index
    %c0_5 = arith.constant 0 : index
    %13 = vector.load %arg1[%c41, %c0_5] : memref<48x128xf32, #tpu.memory_space<vmem>>, vector<1x32xf32>
    %cst = arith.constant dense<0.000000e+00> : vector<32xf32>
    %14 = vector.multi_reduction <add>, %11, %cst [0] : vector<8x32xf32> to vector<32xf32>
    %15 = vector.shape_cast %14 : vector<32xf32> to vector<1x32xf32>
    %cst_6 = arith.constant 1.250000e-01 : f32
    %16 = vector.broadcast %cst_6 : f32 to vector<1x32xf32>
    %17 = arith.mulf %15, %16 : vector<1x32xf32>
    %18 = arith.mulf %11, %11 : vector<8x32xf32>
    %cst_7 = arith.constant dense<0.000000e+00> : vector<32xf32>
    %19 = vector.multi_reduction <add>, %18, %cst_7 [0] : vector<8x32xf32> to vector<32xf32>
    %20 = vector.shape_cast %19 : vector<32xf32> to vector<1x32xf32>
    %cst_8 = arith.constant 1.250000e-01 : f32
    %21 = vector.broadcast %cst_8 : f32 to vector<1x32xf32>
    %22 = arith.mulf %20, %21 : vector<1x32xf32>
    %23 = arith.mulf %17, %17 : vector<1x32xf32>
    %24 = arith.subf %22, %23 : vector<1x32xf32>
    %cst_9 = arith.constant 0.000000e+00 : f32
    %25 = vector.broadcast %cst_9 : f32 to vector<1x32xf32>
    %26 = arith.maximumf %24, %25 : vector<1x32xf32>
    %cst_10 = arith.constant 9.99999974E-6 : f32
    %27 = vector.broadcast %cst_10 : f32 to vector<1x32xf32>
    %28 = arith.addf %26, %27 : vector<1x32xf32>
    %29 = math.rsqrt %28 : vector<1x32xf32>
    %30 = arith.mulf %12, %29 : vector<1x32xf32>
    %31 = arith.mulf %17, %30 : vector<1x32xf32>
    %32 = arith.subf %13, %31 : vector<1x32xf32>
    %33 = vector.broadcast %30 : vector<1x32xf32> to vector<8x32xf32>
    %34 = arith.mulf %11, %33 : vector<8x32xf32>
    %35 = vector.broadcast %32 : vector<1x32xf32> to vector<8x32xf32>
    %36 = arith.addf %34, %35 : vector<8x32xf32>
    %cst_11 = arith.constant 0.00999999977 : f32
    %37 = vector.broadcast %cst_11 : f32 to vector<8x32xf32>
    %38 = arith.mulf %37, %36 : vector<8x32xf32>
    %39 = arith.maximumf %36, %38 : vector<8x32xf32>
    %c8 = arith.constant 8 : index
    %c0_12 = arith.constant 0 : index
    %40 = vector.load %arg1[%c8, %c0_12] : memref<48x128xf32, #tpu.memory_space<vmem>>, vector<32x64xf32>
    %cst_13 = arith.constant dense<0.000000e+00> : vector<8x64xf32>
    %41 = tpu.matmul %39, %40, %cst_13 {dimension_numbers = #tpu.dot_dimension_numbers<[1], [0], [0], [1], [0, 0, 1, 1], [], []>} : vector<8x32xf32>, vector<32x64xf32>, vector<8x64xf32> -> vector<8x64xf32>
    %c42 = arith.constant 42 : index
    %c0_14 = arith.constant 0 : index
    %42 = vector.load %arg1[%c42, %c0_14] : memref<48x128xf32, #tpu.memory_space<vmem>>, vector<1x64xf32>
    %c43 = arith.constant 43 : index
    %c0_15 = arith.constant 0 : index
    %43 = vector.load %arg1[%c43, %c0_15] : memref<48x128xf32, #tpu.memory_space<vmem>>, vector<1x64xf32>
    %cst_16 = arith.constant dense<0.000000e+00> : vector<64xf32>
    %44 = vector.multi_reduction <add>, %41, %cst_16 [0] : vector<8x64xf32> to vector<64xf32>
    %45 = vector.shape_cast %44 : vector<64xf32> to vector<1x64xf32>
    %cst_17 = arith.constant 1.250000e-01 : f32
    %46 = vector.broadcast %cst_17 : f32 to vector<1x64xf32>
    %47 = arith.mulf %45, %46 : vector<1x64xf32>
    %48 = arith.mulf %41, %41 : vector<8x64xf32>
    %cst_18 = arith.constant dense<0.000000e+00> : vector<64xf32>
    %49 = vector.multi_reduction <add>, %48, %cst_18 [0] : vector<8x64xf32> to vector<64xf32>
    %50 = vector.shape_cast %49 : vector<64xf32> to vector<1x64xf32>
    %cst_19 = arith.constant 1.250000e-01 : f32
    %51 = vector.broadcast %cst_19 : f32 to vector<1x64xf32>
    %52 = arith.mulf %50, %51 : vector<1x64xf32>
    %53 = arith.mulf %47, %47 : vector<1x64xf32>
    %54 = arith.subf %52, %53 : vector<1x64xf32>
    %cst_20 = arith.constant 0.000000e+00 : f32
    %55 = vector.broadcast %cst_20 : f32 to vector<1x64xf32>
    %56 = arith.maximumf %54, %55 : vector<1x64xf32>
    %cst_21 = arith.constant 9.99999974E-6 : f32
    %57 = vector.broadcast %cst_21 : f32 to vector<1x64xf32>
    %58 = arith.addf %56, %57 : vector<1x64xf32>
    %59 = math.rsqrt %58 : vector<1x64xf32>
    %60 = arith.mulf %42, %59 : vector<1x64xf32>
    %61 = arith.mulf %47, %60 : vector<1x64xf32>
    %62 = arith.subf %43, %61 : vector<1x64xf32>
    %63 = vector.broadcast %60 : vector<1x64xf32> to vector<8x64xf32>
    %64 = arith.mulf %41, %63 : vector<8x64xf32>
    %65 = vector.broadcast %62 : vector<1x64xf32> to vector<8x64xf32>
    %66 = arith.addf %64, %65 : vector<8x64xf32>
    %cst_22 = arith.constant 0.00999999977 : f32
    %67 = vector.broadcast %cst_22 : f32 to vector<8x64xf32>
    %68 = arith.mulf %67, %66 : vector<8x64xf32>
    %69 = arith.maximumf %66, %68 : vector<8x64xf32>
    %c0_23 = arith.constant 0 : index
    %c0_24 = arith.constant 0 : index
    %70 = vector.load %arg2[%c0_23, %c0_24] : memref<8x64xf32, #tpu.memory_space<vmem>>, vector<8x64xf32>
    tpu.vector_store %arg2[%c0_23, %c0_24], %69 {strides = array<i32>} : memref<8x64xf32, #tpu.memory_space<vmem>>, vector<8x64xf32>,
    return
  }
}

</mosaic_0001>

<llo_original>
// kernel: ball_pose_vae_encoder.1
$region0: #{ball_pose_vae_encoder.1}
  #allocation0 [shape = 'u32[]', space=smem, size = 0x4, offset = 0x4, fixed_abs, tag = 'smem constant byte address 0x4 - core index']
  #allocation1 [shape = 'u32[144,128]{1,0:T(1,128)}', space=vmem, size = 0x12000, scoped, tag = 'internal scratch']
  %s0 = inlined_call_operand.vmem [shape: f32[8,2], index: 0, kind: input, shape index: {}]
  %s1 = inlined_call_operand.hbm [shape: f32[48,128], index: 1, kind: input, shape index: {}]
  %s2 = inlined_call_operand.hbm [shape: f32[8,64], index: 2, kind: output, shape index: {}]
  %s3 = sld [smem:[#allocation0]]
  $region22: #{ball_pose_vae_encoder.1} parent=0
    _
  %s5 = ssub.s32 1, %s3
  %s6 = scalar_select 0, %s5, %s3
  $region1: #{ball_pose_vae_encoder.1} parent=0
    #allocation2 [shape = 'u8[24576]{0}', space=vmem, size = 0x6000, scoped, tag = 'input window, operand 1, single buffered']
    #allocation3 [shape = 's32[1]{0}', space=sflag, size = 0x4, scoped, tag = 'scoped memory for ball_pose_vae_encoder.1']
    #allocation4 [shape = 's32[1]{0}', space=sflag, size = 0x4, scoped, tag = 'scoped memory for ball_pose_vae_encoder.1']
    #allocation5 [shape = 'u8[4096]{0}', space=vmem, size = 0x1000, scoped, tag = 'output window, operand 0, single buffered']
    %7 = vsyncpa [#allocation3], 0
    %8 = vsyncpa [#allocation4], 0
    // Predicated region
    $region2: #{ball_pose_vae_encoder.1} parent=1 // pred_check
      _
    $region3: #{ball_pose_vae_encoder.1} parent=1 // pred_check_branch
      %10 = sbr.rel (0) target = $region5
    $region4: #{ball_pose_vae_encoder.1} parent=1 // pred_region
      _
    $region5: #{ball_pose_vae_encoder.1} parent=1 // pred_fallthru
      _
    // Predicated region
    $region6: #{ball_pose_vae_encoder.1} parent=1 // pred_check
      _
    $region7: #{ball_pose_vae_encoder.1} parent=1 // pred_check_branch
      %12 = sbr.rel (0) target = $region9
    $region8: #{ball_pose_vae_encoder.1} parent=1 // pred_region
      %s14 = ssub.s32 768, 768
      %15 = vsyncadd [#allocation3], %s14
      %s16 = sshll.u32 [#allocation2], 4
      %s17 = int_to_ptr.vmem [resolvable:$true] %s16
      %22 = dma.hbm_to_vmem [thread:$0]  %s1, 768, %s17, [#allocation3], 128, 128, 8
    $region9: #{ball_pose_vae_encoder.1} parent=1 // pred_fallthru
      _
    // Predicated region
    $region10: #{ball_pose_vae_encoder.1} parent=1 // pred_check
      _
    $region11: #{ball_pose_vae_encoder.1} parent=1 // pred_check_branch
      %24 = sbr.rel (0) target = $region13
    $region12: #{ball_pose_vae_encoder.1} parent=1 // pred_region
      %25 = dma.done [#allocation3], 768
    $region13: #{ball_pose_vae_encoder.1} parent=1 // pred_fallthru
      _
    %v26 = vld [vmem:[%s0] sm:$0xff]
    %v27 = vld [vmem:[#allocation2] sm:$0x1]
    %29 = vset.pattern.permute.xlu0 0
    %30 = vperm.xlu0 %29, %v26
    %v31 = vpop.permute.xlu0 %30
    %v33 = vlaneseq
    %v34 = vshrl.u32 %v33, 7
    %v35 = vsub.s32 0, %v34
    %v36 = vrot.slane %v27, %v35
    %v37 = vmul.f32 %v31, %v36
    %v38 = vld [vmem:[#allocation2 + $0x1] sm:$0x1]
    %39 = vset.pattern.permute.xlu0 1
    %40 = vperm.xlu0 %39, %v26
    %v41 = vpop.permute.xlu0 %40
    %v43 = vlaneseq
    %v44 = vshrl.u32 %v43, 7
    %v45 = vsub.s32 0, %v44
    %v46 = vrot.slane %v38, %v45
    %v47 = vmul.f32 %v41, %v46
    %v48 = vadd.f32 %v37, %v47
    %v49 = vld [vmem:[#allocation2 + $0x28] sm:$0x1]
    %v50 = vld [vmem:[#allocation2 + $0x29] sm:$0x1]
    %vm51 = vcmask 261120
    %v52 = vsel %vm51, %v48, 0.0
    %v53 = vrot.slane %v52, 4
    %v54 = vadd.f32 %v52, %v53
    %v55 = vrot.slane %v54, 2
    %v56 = vadd.f32 %v54, %v55
    %v57 = vrot.slane %v56, 1
    %v58 = vadd.f32 %v56, %v57
    %v59 = vmul.f32 %v58, 0.125
    %v60 = vmul.f32 %v48, %v48
    %v61 = vsel %vm51, %v60, 0.0
    %v62 = vrot.slane %v61, 4
    %v63 = vadd.f32 %v61, %v62
    %v64 = vrot.slane %v63, 2
    %v65 = vadd.f32 %v63, %v64
    %v66 = vrot.slane %v65, 1
    %v67 = vadd.f32 %v65, %v66
    %v68 = vmul.f32 %v67, 0.125
    %v69 = vmul.f32 %v59, %v59
    %v70 = vsub.f32 %v68, %v69
    %v71 = vmax.f32 %v70, 0.0
    %v72 = vadd.f32 %v71, 1e-05
    %v73 = vrsqrt.pop %v72
    %v74 = vmul.f32 %v49, %v73
    %v75 = vmul.f32 %v59, %v74
    %v76 = vsub.f32 %v50, %v75
    %v77 = vlaneseq
    %v78 = vshrl.u32 %v77, 7
    %v79 = vsub.s32 0, %v78
    %v80 = vrot.slane %v74, %v79
    %v81 = vmul.f32 %v48, %v80
    %v82 = vlaneseq
    %v83 = vshrl.u32 %v82, 7
    %v84 = vsub.s32 0, %v83
    %v85 = vrot.slane %v76, %v84
    %v86 = vadd.f32 %v81, %v85
    %v87 = vmul.f32 %v86, 0.01
    %v88 = vmax.f32 %v86, %v87
    %v89 = vld [vmem:[#allocation2 + $0x8] sm:$0xff]
    %v90 = vld [vmem:[#allocation2 + $0x10] sm:$0xff]
    %v91 = vld [vmem:[#allocation2 + $0x18] sm:$0xff]
    %v92 = vld [vmem:[#allocation2 + $0x20] sm:$0xff]
    %v94 = vsel %vm51, %v88, 0
    %96 = vmatprep.subr.mxu0 0.0
    %97 = vmatpush1.msra.mxu0 0.0
    %98 = vmatprep.subr.mxu0 0.0
    %99 = vmatpush1.msra.mxu0 0.0
    %100 = vmatprep.subr.mxu0 0.0
    %101 = vmatpush1.msra.mxu0 0.0
    %102 = vmatprep.subr.mxu0 0.0
    %103 = vmatpush1.msra.mxu0 0.0
    %104 = vmatprep.subr.mxu0 0.0
    %105 = vmatpush1.msra.mxu0 0.0
    %106 = vmatprep.subr.mxu0 0.0
    %107 = vmatpush1.msra.mxu0 0.0
    %108 = vmatprep.subr.mxu0 0.0
    %109 = vmatpush1.msra.mxu0 0.0
    %110 = vmatprep.subr.mxu0 0.0
    %111 = vmatpush1.msra.mxu0 0.0
    %112 = vmatprep.subr.mxu0 0.0
    %113 = vmatpush1.msra.mxu0 0.0
    %114 = vmatprep.subr.mxu0 0.0
    %115 = vmatpush1.msra.mxu0 0.0
    %116 = vmatprep.subr.mxu0 0.0
    %117 = vmatpush1.msra.mxu0 0.0
    %118 = vmatprep.subr.mxu0 0.0
    %119 = vmatpush1.msra.mxu0 0.0
    %120 = vmatprep.subr.mxu0 0.0
    %121 = vmatpush1.msra.mxu0 %v92
    %122 = vmatprep.subr.mxu0 0.0
    %123 = vmatpush1.msra.mxu0 %v91
    %124 = vmatprep.subr.mxu0 0.0
    %125 = vmatpush1.msra.mxu0 %v90
    %126 = vmatprep.subr.mxu0 0.0
    %127 = vmatpush1.msra.mxu0 %v89
    %128 = vmatprep.subr.mxu0 0.0
    %129 = vmatpush2.msra.mxu0 0.0
    %130 = vmatprep.subr.mxu0 0.0
    %131 = vmatpush2.msra.mxu0 0.0
    %132 = vmatprep.subr.mxu0 0.0
    %133 = vmatpush2.msra.mxu0 0.0
    %134 = vmatprep.subr.mxu0 0.0
    %135 = vmatpush2.msra.mxu0 0.0
    %136 = vmatprep.subr.mxu0 0.0
    %137 = vmatpush2.msra.mxu0 0.0
    %138 = vmatprep.subr.mxu0 0.0
    %139 = vmatpush2.msra.mxu0 0.0
    %140 = vmatprep.subr.mxu0 0.0
    %141 = vmatpush2.msra.mxu0 0.0
    %142 = vmatprep.subr.mxu0 0.0
    %143 = vmatpush2.msra.mxu0 0.0
    %144 = vmatprep.subr.mxu0 0.0
    %145 = vmatpush2.msra.mxu0 0.0
    %146 = vmatprep.subr.mxu0 0.0
    %147 = vmatpush2.msra.mxu0 0.0
    %148 = vmatprep.subr.mxu0 0.0
    %149 = vmatpush2.msra.mxu0 0.0
    %150 = vmatprep.subr.mxu0 0.0
    %151 = vmatpush2.msra.mxu0 0.0
    %152 = vmatprep.subr.mxu0 0.0
    %153 = vmatpush2.msra.mxu0 0.0
    %154 = vmatprep.subr.mxu0 0.0
    %155 = vmatpush2.msra.mxu0 0.0
    %156 = vmatprep.subr.mxu0 0.0
    %157 = vmatpush2.msra.mxu0 0.0
    %158 = vmatprep.subr.mxu0 0.0
    %159 = vmatpush2.msra.mxu0 0.0
    %160 = vmatprep.mubr.f32.mxu0 0.0
    %161 = vmatmul.mubr.f32.gmra.mxu0 %v94
    %v162 = vpop.f32.mrf.mxu0
    %v163 = vadd.f32 0.0, %v162
    %v164 = vpop.f32.mrf.mxu0
    %165 = vdwg.mxu0
    %v166 = vld [vmem:[#allocation2 + $0x2a] sm:$0x1]
    %v167 = vld [vmem:[#allocation2 + $0x2b] sm:$0x1]
    %vm168 = vcmask 523264
    %v169 = vsel %vm168, %v163, 0.0
    %v170 = vrot.slane %v169, 4
    %v171 = vadd.f32 %v169, %v170
    %v172 = vrot.slane %v171, 2
    %v173 = vadd.f32 %v171, %v172
    %v174 = vrot.slane %v173, 1
    %v175 = vadd.f32 %v173, %v174
    %v176 = vmul.f32 %v175, 0.125
    %v177 = vmul.f32 %v163, %v163
    %v178 = vsel %vm168, %v177, 0.0
    %v179 = vrot.slane %v178, 4
    %v180 = vadd.f32 %v178, %v179
    %v181 = vrot.slane %v180, 2
    %v182 = vadd.f32 %v180, %v181
    %v183 = vrot.slane %v182, 1
    %v184 = vadd.f32 %v182, %v183
    %v185 = vmul.f32 %v184, 0.125
    %v186 = vmul.f32 %v176, %v176
    %v187 = vsub.f32 %v185, %v186
    %v188 = vmax.f32 %v187, 0.0
    %v189 = vadd.f32 %v188, 1e-05
    %v190 = vrsqrt.pop %v189
    %v191 = vmul.f32 %v166, %v190
    %v192 = vmul.f32 %v176, %v191
    %v193 = vsub.f32 %v167, %v192
    %v194 = vlaneseq
    %v195 = vshrl.u32 %v194, 7
    %v196 = vsub.s32 0, %v195
    %v197 = vrot.slane %v191, %v196
    %v198 = vmul.f32 %v163, %v197
    %v199 = vlaneseq
    %v200 = vshrl.u32 %v199, 7
    %v201 = vsub.s32 0, %v200
    %v202 = vrot.slane %v193, %v201
    %v203 = vadd.f32 %v198, %v202
    %v204 = vmul.f32 %v203, 0.01
    %v205 = vmax.f32 %v203, %v204
    %206 = vst.msk [vmem:[#allocation5] sm:$0xff] %vm168, %v205
    // Predicated region
    $region14: #{ball_pose_vae_encoder.1} parent=1 // pred_check
      _
    $region15: #{ball_pose_vae_encoder.1} parent=1 // pred_check_branch
      %208 = sbr.rel (0) target = $region17
    $region16: #{ball_pose_vae_encoder.1} parent=1 // pred_region
      %s210 = ssub.s32 128, 128
      %211 = vsyncadd [#allocation4], %s210
      %s213 = sshll.u32 [#allocation5], 4
      %s214 = int_to_ptr.vmem [resolvable:$true] %s213
      %216 = dma.vmem_to_hbm [thread:$0]  %s214, 128, %s2, [#allocation4]
    $region17: #{ball_pose_vae_encoder.1} parent=1 // pred_fallthru
      _
    // Predicated region
    $region18: #{ball_pose_vae_encoder.1} parent=1 // pred_check
      _
    $region19: #{ball_pose_vae_encoder.1} parent=1 // pred_check_branch
      %218 = sbr.rel (0) target = $region21
    $region20: #{ball_pose_vae_encoder.1} parent=1 // pred_region
      %219 = dma.done [#allocation4], 128
    $region21: #{ball_pose_vae_encoder.1} parent=1 // pred_fallthru
      _
    %220 = vsyncpa [#allocation3], 1
    %221 = vsyncpa [#allocation4], 1

</llo_original>
